<compile_context>
chip_gen: v5e
topology: v5e:2x2
jax: 0.10.0
libtpu: 0.0.40
codegen_flags: <defaults>
</compile_context>

<pallas_src>
import jax
import jax.numpy as jnp
from jax.experimental import pallas as pl
from jax.experimental.pallas import tpu as pltpu

_MAX_COLS = 8192                        # cap on the lane-axis width of the 2-D view
_TARGET_BLOCK_BYTES = 4 * 1024 * 1024   # ~4 MiB tiles
_VMEM_LIMIT_BYTES = 48 * 1024 * 1024    # fits v7x (64 MiB phys) with headroom


def _add_kernel(const_ref, x_ref, o_ref):
    # const lives in SMEM as a (1,) f32 scalar; one scalar convert per grid
    # step is negligible (kernel is pure DMA/HBM bound).
    c = const_ref[0].astype(o_ref.dtype)
    o_ref[...] = x_ref[...].astype(o_ref.dtype) + c


def _result_dtype(x_dtype, const):
    """PyTorch-style scalar promotion: python int/bool scalars never promote;
    a python float keeps a floating tensor's dtype but promotes integer
    tensors to float32."""
    if isinstance(const, (bool, int)) and not isinstance(const, float):
        return x_dtype
    if jnp.issubdtype(x_dtype, jnp.floating):
        return x_dtype
    return jnp.dtype(jnp.float32)


def _choose_cols(n, max_cols=_MAX_COLS):
    """Largest lane-friendly column width that divides numel (no padding)."""
    if n <= max_cols:
        return n
    # Prefer the largest multiple-of-128 divisor (fully lane-dense stores).
    c = (max_cols // 128) * 128
    while c >= 128:
        if n % c == 0:
            return c
        c -= 128
    # numel not divisible by 128: largest plain divisor <= max_cols so the
    # block width stays as lane-dense as possible (only the ragged lane tail
    # of each row is masked).
    for c in range(max_cols, 0, -1):
        if n % c == 0:
            return c
    return 1


def _choose_layout(n, itemsize, target_block_bytes):
    """Pick a pad-free (rows, cols) view of the flat data and block sizes."""
    pack = 8 * max(1, 4 // itemsize)          # sublane packing of the dtype
    cols = _choose_cols(n)
    if cols >= 128 or n <= _MAX_COLS:
        rows = n // cols
        tile_cols = cols                      # cols <= 8192 -> one row <= 32 KiB
        row_bytes = max(cols * itemsize, 1)
        tile_rows = max(pack, (target_block_bytes // row_bytes) // pack * pack)
        if tile_rows >= rows:
            tile_rows = rows                  # single block over all rows
        # Guarantee >=2 (ideally >=4) grid steps so both v7x TensorCores get
        # work; keep every step at >= one full sublane pack.
        want = 4 if rows >= 4 * pack else (2 if rows >= 2 * pack else 1)
        while tile_rows > pack and pl.cdiv(rows, tile_rows) < want:
            tile_rows = max(pack, ((tile_rows // 2) + pack - 1) // pack * pack)
    else:
        # Pathological numel (no divisor >= 128, e.g. a big prime): keep a
        # single row and tile the lane axis in multiples of 128 instead.
        # VMEM pads the sublane dim to `pack`, so budget pack*itemsize bytes
        # per lane element.
        rows, cols, tile_rows = 1, n, 1
        tile_cols = max(128, (target_block_bytes // (pack * itemsize)) // 128 * 128)
        if tile_cols >= cols:
            tile_cols = cols
    return rows, cols, tile_rows, tile_cols


def add_const(x, const, *, target_block_bytes=_TARGET_BLOCK_BYTES, donate=False):
    """const + x computed in a Pallas TPU kernel. x: any shape (e.g. NCHW)."""
    x = jnp.asarray(x)
    orig_shape = x.shape
    in_dtype = x.dtype
    out_dtype = jnp.dtype(_result_dtype(in_dtype, const))
    n = x.size
    if n == 0:
        return jnp.zeros(orig_shape, out_dtype)

    in_bytes = jnp.dtype(in_dtype).itemsize
    out_bytes = jnp.dtype(out_dtype).itemsize
    itemsize = max(in_bytes, out_bytes)

    rows, cols, tile_rows, tile_cols = _choose_layout(n, itemsize, target_block_bytes)

    # Metadata-only reshape of the contiguous buffer: no pad, no extra HBM pass.
    x2d = jnp.reshape(x, (rows, cols))
    const_arr = jnp.full((1,), const, dtype=jnp.float32)

    grid = (pl.cdiv(rows, tile_rows), pl.cdiv(cols, tile_cols))

    out2d = pl.pallas_call(
        _add_kernel,
        out_shape=jax.ShapeDtypeStruct((rows, cols), out_dtype),
        grid_spec=pltpu.PrefetchScalarGridSpec(
            num_scalar_prefetch=0,
            grid=grid,
            in_specs=[
                pl.BlockSpec(memory_space=pltpu.MemorySpace.SMEM),          # const
                pl.BlockSpec((tile_rows, tile_cols), lambda i, j: (i, j)),  # data
            ],
            out_specs=pl.BlockSpec((tile_rows, tile_cols), lambda i, j: (i, j)),
        ),
        compiler_params=pltpu.CompilerParams(
            dimension_semantics=("parallel", "parallel"),
            vmem_limit_bytes=_VMEM_LIMIT_BYTES,
        ),
        cost_estimate=pl.CostEstimate(
            flops=n, transcendentals=0,
            bytes_accessed=n * (in_bytes + out_bytes)),
        input_output_aliases=({1: 0} if (donate and in_dtype == out_dtype) else {}),
    )(const_arr, x2d)

    return jnp.reshape(out2d, orig_shape)


if __name__ == "__main__":
    k1, k2, k3 = jax.random.split(jax.random.PRNGKey(0), 3)
    const = 0.75  # deterministic "parameter" from _Add.__init__(const)

    # Primary case: NCHW conv-style input, batch=2, channels=4, 16x16 spatial.
    x = jax.random.normal(k1, (2, 4, 16, 16), dtype=jnp.float32)
    y = jax.block_until_ready(add_const(x, const))
    assert y.shape == x.shape and y.dtype == x.dtype
    assert jnp.allclose(y, const + x, atol=1e-6, rtol=1e-6)

    # Ragged case: numel not divisible by 128 (exercises the masked-lane path).
    x2 = jax.random.normal(k2, (2, 3, 7, 11), dtype=jnp.float32)
    y2 = jax.block_until_ready(add_const(x2, const))
    assert y2.shape == x2.shape and y2.dtype == x2.dtype
    assert jnp.allclose(y2, const + x2, atol=1e-6, rtol=1e-6)

    # Multi-step grid case: rows split into >=2 blocks (megacore sharding path,
    # ragged last row-block handled by grid masking).
    x3 = jax.random.normal(k3, (4, 8, 64, 96), dtype=jnp.float32)
    y3 = jax.block_until_ready(add_const(x3, const))
    assert y3.shape == x3.shape and y3.dtype == x3.dtype
    assert jnp.allclose(y3, const + x3, atol=1e-6, rtol=1e-6)

    print("KERNEL_OK")
</pallas_src>

<mosaic_0001>
module attributes {stable_mosaic.version = 11 : i64} {
  func.func @_add_kernel(%arg0: i32, %arg1: i32, %arg2: memref<1xf32, #tpu.memory_space<smem>>, %arg3: memref<1x2048xf32, #tpu.memory_space<vmem>>, %arg4: memref<1x2048xf32, #tpu.memory_space<vmem>>) attributes {dimension_semantics = [#tpu.dimension_semantics<parallel>, #tpu.dimension_semantics<parallel>], iteration_bounds = array<i64: 1, 1>, scalar_prefetch = 0 : i64, scratch_operands = 0 : i64, tpu.core_type = #tpu.core_type<tc>, window_params = [{transform_indices = @transform_0, window_bounds = array<i64: 1>}, {transform_indices = @transform_1, window_bounds = array<i64: 1, 2048>}, {transform_indices = @transform_2, window_bounds = array<i64: 1, 2048>}]} {
    %c0 = arith.constant 0 : index
    %0 = memref.load %arg2[%c0] : memref<1xf32, #tpu.memory_space<smem>>
    %c0_0 = arith.constant 0 : index
    %c0_1 = arith.constant 0 : index
    %1 = vector.load %arg3[%c0_0, %c0_1] : memref<1x2048xf32, #tpu.memory_space<vmem>>, vector<1x2048xf32>
    %2 = vector.broadcast %0 : f32 to vector<1x2048xf32>
    %3 = arith.addf %1, %2 : vector<1x2048xf32>
    %c0_2 = arith.constant 0 : index
    %c0_3 = arith.constant 0 : index
    %4 = vector.load %arg4[%c0_2, %c0_3] : memref<1x2048xf32, #tpu.memory_space<vmem>>, vector<1x2048xf32>
    tpu.vector_store %arg4[%c0_2, %c0_3], %3 {strides = array<i32>} : memref<1x2048xf32, #tpu.memory_space<vmem>>, vector<1x2048xf32>,
    return
  }
  func.func @transform_0(%arg0: i32, %arg1: i32) -> i32 {
    %c0_i32 = arith.constant 0 : i32
    %c0_i32_0 = arith.constant 0 : i32
    return %c0_i32 : i32
  }
  func.func @transform_1(%arg0: i32, %arg1: i32) -> (i32, i32) {
    %c0_i32 = arith.constant 0 : i32
    return %arg0, %arg1 : i32, i32
  }
  func.func @transform_2(%arg0: i32, %arg1: i32) -> (i32, i32) {
    %c0_i32 = arith.constant 0 : i32
    return %arg0, %arg1 : i32, i32
  }
}

</mosaic_0001>

<llo_original>
// kernel: tpu_custom_call.1
$region0: #{tpu_custom_call.1}
  #allocation0 [shape = 'u32[]', space=smem, size = 0x4, offset = 0x4, fixed_abs, tag = 'smem constant byte address 0x4 - core index']
  #allocation1 [shape = 'u32[72,128]{1,0:T(1,128)}', space=vmem, size = 0x9000, scoped, tag = 'internal scratch']
  #allocation2 [shape = 'f32[1]{0:T(128)S(6)}', space=smem, size = 0x200, scoped, tag = 'scoped memory for tpu_custom_call.1']
  %s0 = inlined_call_operand.<no memory space> [shape: f32[1], index: 0, kind: input, shape index: {}]
  %s1 = inlined_call_operand.hbm [shape: f32[1,2048], index: 1, kind: input, shape index: {}]
  %s2 = inlined_call_operand.hbm [shape: f32[1,2048], index: 2, kind: output, shape index: {}]
  %s3 = sld [smem:[#allocation0]]
  $region22: #{tpu_custom_call.1} parent=0
    _
  %s5 = ssub.s32 1, %s3
  %s6 = scalar_select 0, %s5, %s3
  %7 = sst [smem:[#allocation2]] %s0
  $region1: #{tpu_custom_call.1} parent=0
    #allocation3 [shape = 'u8[8192]{0}', space=vmem, size = 0x2000, scoped, tag = 'input window, operand 1, single buffered']
    #allocation4 [shape = 's32[1]{0}', space=sflag, size = 0x4, scoped, tag = 'scoped memory for tpu_custom_call.1']
    #allocation5 [shape = 's32[1]{0}', space=sflag, size = 0x4, scoped, tag = 'scoped memory for tpu_custom_call.1']
    #allocation6 [shape = 'u8[8192]{0}', space=vmem, size = 0x2000, scoped, tag = 'output window, operand 0, single buffered']
    %8 = vsyncpa [#allocation4], 0
    %9 = vsyncpa [#allocation5], 0
    // Predicated region
    $region2: #{tpu_custom_call.1} parent=1 // pred_check
      _
    $region3: #{tpu_custom_call.1} parent=1 // pred_check_branch
      %11 = sbr.rel (0) target = $region5
    $region4: #{tpu_custom_call.1} parent=1 // pred_region
      _
    $region5: #{tpu_custom_call.1} parent=1 // pred_fallthru
      _
    // Predicated region
    $region6: #{tpu_custom_call.1} parent=1 // pred_check
      _
    $region7: #{tpu_custom_call.1} parent=1 // pred_check_branch
      %13 = sbr.rel (0) target = $region9
    $region8: #{tpu_custom_call.1} parent=1 // pred_region
      %15 = vsyncadd [#allocation4], 0
      %s17 = sshll.u32 %s1, 4
      %s18 = int_to_ptr.hbm [resolvable:$true] %s17
      %s19 = sshll.u32 [#allocation3], 4
      %s20 = int_to_ptr.vmem [resolvable:$true] %s19
      %22 = dma.hbm_to_vmem [thread:$0]  %s18, 256, %s20, [#allocation4]
    $region9: #{tpu_custom_call.1} parent=1 // pred_fallthru
      _
    // Predicated region
    $region10: #{tpu_custom_call.1} parent=1 // pred_check
      _
    $region11: #{tpu_custom_call.1} parent=1 // pred_check_branch
      %24 = sbr.rel (0) target = $region13
    $region12: #{tpu_custom_call.1} parent=1 // pred_region
      %26 = dma.done [#allocation4], 256
    $region13: #{tpu_custom_call.1} parent=1 // pred_fallthru
      _
    %s27 = sld [smem:[#allocation2]]
    %v28 = vld [vmem:[#allocation3] sm:$0xff]
    %v29 = vld [vmem:[#allocation3 + $0x8] sm:$0xff]
    %v30 = vstv %s27
    %v31 = vadd.f32 %v28, %v30
    %v32 = vadd.f32 %v29, %v30
    %33 = vst [vmem:[#allocation6] sm:$0xff] %v31
    %34 = vst [vmem:[#allocation6 + $0x8] sm:$0xff] %v32
    // Predicated region
    $region14: #{tpu_custom_call.1} parent=1 // pred_check
      _
    $region15: #{tpu_custom_call.1} parent=1 // pred_check_branch
      %36 = sbr.rel (0) target = $region17
    $region16: #{tpu_custom_call.1} parent=1 // pred_region
      %38 = vsyncadd [#allocation5], 0
      %s40 = sshll.u32 [#allocation6], 4
      %s41 = int_to_ptr.vmem [resolvable:$true] %s40
      %s42 = sshll.u32 %s2, 4
      %s43 = int_to_ptr.hbm [resolvable:$true] %s42
      %45 = dma.vmem_to_hbm [thread:$0]  %s41, 256, %s43, [#allocation5]
    $region17: #{tpu_custom_call.1} parent=1 // pred_fallthru
      _
    // Predicated region
    $region18: #{tpu_custom_call.1} parent=1 // pred_check
      _
    $region19: #{tpu_custom_call.1} parent=1 // pred_check_branch
      %47 = sbr.rel (0) target = $region21
    $region20: #{tpu_custom_call.1} parent=1 // pred_region
      %49 = dma.done [#allocation5], 256
    $region21: #{tpu_custom_call.1} parent=1 // pred_fallthru
      _
    %50 = vsyncpa [#allocation4], 1
    %51 = vsyncpa [#allocation5], 1

</llo_original>
